<compile_context>
chip_gen: v5e
topology: v5e:2x2
jax: 0.10.0
libtpu: 0.0.40
codegen_flags: <defaults>
</compile_context>

<pallas_src>
import functools

import jax
import jax.numpy as jnp
from jax.experimental import pallas as pl
from jax.experimental.pallas import tpu as pltpu


def _avg_k_from_last_kernel(x_ref, mask_ref, o_ref, acc_ref, *, ts, tol, use_mxu):
    # x_ref:    [tb, ts, th]   layer tile, native dtype (bf16 / f32 / ...)
    # mask_ref: [tb, 1, S] (MXU path, x.dtype) or [tb, S, 1] (VPU path, f32);
    #           resident across the h and s grid axes (block index = b only).
    # o_ref:    [tb, 1, th]    f32 pooled-output block
    # acc_ref:  [tb, 1, th]    f32 numerator accumulator (VMEM scratch)
    s = pl.program_id(2)

    @pl.when(s == 0)
    def _init():
        acc_ref[...] = jnp.zeros_like(acc_ref)

    x = x_ref[...]                                   # native dtype, streamed
    start = pl.multiple_of(s * ts, ts)

    if use_mxu:
        # Masked sum over S as a batched (1 x ts) @ (ts x th) MXU contraction,
        # bf16 operands, f32 accumulation.  Keeps the VALU slot free.
        m = mask_ref[:, :, pl.ds(start, ts)]         # [tb, 1, ts]
        acc_ref[...] += jnp.einsum(
            "bxs,bsh->bxh", m, x, preferred_element_type=jnp.float32)
    else:
        # Full-precision VPU path: widen in-vreg, multiply, sublane-reduce.
        m = mask_ref[:, pl.ds(start, ts), :]         # [tb, ts, 1]  (f32)
        acc_ref[...] += jnp.sum(x.astype(jnp.float32) * m, axis=1, keepdims=True)

    @pl.when(s == pl.num_programs(2) - 1)
    def _finalize():
        sum_axis = 2 if use_mxu else 1
        den = jnp.sum(mask_ref[...].astype(jnp.float32), axis=sum_axis,
                      keepdims=True)                 # [tb, 1, 1]
        o_ref[...] = (acc_ref[...] / (den + tol)).astype(o_ref.dtype)


def _pick_tile(dim, unit, cap):
    """Largest multiple of `unit` that divides `dim` and is <= cap.

    Falls back to the full extent when `dim` is not a multiple of `unit`
    (a full-extent block is always layout-legal)."""
    if dim % unit != 0:
        return dim
    best = unit
    t = 2 * unit
    while t <= dim and t <= cap:
        if dim % t == 0:
            best = t
        t += unit
    return best


def average_k_from_last(encoded_layers, pad_mask, *, k=2, tol=1e-6):
    """encoded_layers: list of [B, S, H] arrays. pad_mask: [B, S] (0/1)."""
    assert k <= len(encoded_layers), "k should be less than the number of encoder layers"
    x = encoded_layers[-k]                           # keep native dtype (no upcast)
    B, S, H = x.shape

    # bf16 -> MXU contraction path; everything else -> exact f32 VPU path.
    use_mxu = x.dtype == jnp.bfloat16
    if use_mxu:
        mask = pad_mask.astype(x.dtype)[:, None, :]      # [B, 1, S], 0/1 exact in bf16
    else:
        mask = pad_mask.astype(jnp.float32)[:, :, None]  # [B, S, 1]

    itemsize = jnp.dtype(x.dtype).itemsize
    th = _pick_tile(H, 128, 512)                     # lane-dense output slab
    tb = _pick_tile(B, 8, 32)

    # Size ts so the streamed x tile stays within the per-buffer budget
    # (BlockSpec double-buffers it).  ~12 MiB/buffer fits v7x's 64 MiB VMEM
    # with headroom and amortizes the ~0.35 us per-step overhead on v5e/v6e.
    x_tile_budget = 12 * 1024 * 1024
    ts_cap = max(128, x_tile_budget // max(tb * th * itemsize, 1))
    ts = _pick_tile(S, 128, ts_cap)

    # Harden the full-extent fallbacks: if an unaligned S or H blew the budget,
    # shrink tb (a pure leading dim, no layout constraint) to a smaller divisor.
    # TODO(synk): pad-and-mask very large dims that are not multiples of 8/128
    # instead of relying on the full-extent fallback.
    while tb > 1 and tb * ts * th * itemsize > x_tile_budget:
        nt = tb - 1
        while B % nt:
            nt -= 1
        tb = nt

    # Guarantee >= 2 "parallel" grid iterations when the shape allows it, so
    # both TensorCores of a megacore part share this mem-bound kernel.
    if (B // tb) * (H // th) < 2:
        if H // th == 1 and th % 256 == 0:
            th //= 2
        elif B // tb == 1 and tb % 16 == 0:
            tb //= 2

    grid = (B // tb, H // th, S // ts)               # reduction axis (S) last
    kernel = functools.partial(_avg_k_from_last_kernel,
                               ts=ts, tol=float(tol), use_mxu=use_mxu)

    if use_mxu:
        mask_spec = pl.BlockSpec((tb, 1, S), lambda b, h, s: (b, 0, 0))
    else:
        mask_spec = pl.BlockSpec((tb, S, 1), lambda b, h, s: (b, 0, 0))

    out = pl.pallas_call(
        kernel,
        out_shape=jax.ShapeDtypeStruct((B, 1, H), jnp.float32),
        grid=grid,
        in_specs=[
            pl.BlockSpec((tb, ts, th), lambda b, h, s: (b, s, h)),   # streamed
            mask_spec,                                               # resident per b
        ],
        out_specs=pl.BlockSpec((tb, 1, th), lambda b, h, s: (b, 0, h)),
        scratch_shapes=[pltpu.VMEM((tb, 1, th), jnp.float32)],       # numerator acc
        compiler_params=pltpu.CompilerParams(
            dimension_semantics=("parallel", "parallel", "arbitrary"),
            vmem_limit_bytes=48 * 1024 * 1024,       # < 64 MiB v7x, ample on v5e/v6e
        ),
    )(x, mask)
    return out.reshape(B, H)


def _reference(encoded_layers, pad_mask, *, k=2, tol=1e-6):
    x = encoded_layers[-k].astype(jnp.float32)
    m = pad_mask.astype(jnp.float32)[:, :, None]
    return jnp.sum(x * m, axis=1) / (jnp.sum(m, axis=1) + tol)


if __name__ == "__main__":
    num_layers, k = 4, 2
    keys = jax.random.split(jax.random.PRNGKey(0), 2 * num_layers)

    # ---- Case 1: small f32 layers (exact VPU path, unaligned small dims) ----
    B, S, H = 2, 8, 32
    layers_f32 = [jax.random.normal(keys[i], (B, S, H), dtype=jnp.float32)
                  for i in range(num_layers)]
    lengths = jnp.array([6, 3], dtype=jnp.int32)
    pad_mask = (jnp.arange(S)[None, :] < lengths[:, None]).astype(jnp.int32)   # [B, S]

    out = jax.block_until_ready(average_k_from_last(layers_f32, pad_mask, k=k, tol=1e-6))
    ref = _reference(layers_f32, pad_mask, k=k, tol=1e-6)
    assert out.shape == (B, H)
    assert jnp.allclose(out, ref, atol=1e-5, rtol=1e-5), "f32 mismatch vs reference"

    # ---- Case 2: bf16 layers (MXU contraction path, aligned tiles) ----------
    B2, S2, H2 = 8, 128, 256
    layers_bf16 = [
        jax.random.normal(keys[num_layers + i], (B2, S2, H2),
                          dtype=jnp.float32).astype(jnp.bfloat16)
        for i in range(num_layers)
    ]
    lengths2 = (jnp.arange(B2, dtype=jnp.int32) * 13 % S2) + 1
    pad_mask2 = (jnp.arange(S2)[None, :] < lengths2[:, None]).astype(jnp.int32)  # [B2, S2]

    out2 = jax.block_until_ready(average_k_from_last(layers_bf16, pad_mask2, k=k, tol=1e-6))
    ref2 = _reference(layers_bf16, pad_mask2, k=k, tol=1e-6)
    assert out2.shape == (B2, H2)
    assert jnp.allclose(out2, ref2, atol=1e-4, rtol=1e-4), "bf16 mismatch vs reference"

    print("KERNEL_OK")
</pallas_src>

<mosaic_0001>
module attributes {stable_mosaic.version = 11 : i64} {
  func.func @_avg_k_from_last_kernel(%arg0: i32, %arg1: i32, %arg2: i32, %arg3: memref<2x8x32xf32, #tpu.memory_space<vmem>>, %arg4: memref<2x8x1xf32, #tpu.memory_space<vmem>>, %arg5: memref<2x1x32xf32, #tpu.memory_space<vmem>>, %arg6: memref<2x1x32xf32, #tpu.memory_space<vmem>>) attributes {dimension_semantics = [#tpu.dimension_semantics<parallel>, #tpu.dimension_semantics<parallel>, #tpu.dimension_semantics<arbitrary>], iteration_bounds = array<i64: 1, 1, 1>, scalar_prefetch = 0 : i64, scratch_operands = 1 : i64, tpu.core_type = #tpu.core_type<tc>, window_params = [{transform_indices = @transform_0, window_bounds = array<i64: 2, 8, 32>}, {transform_indices = @transform_1, window_bounds = array<i64: 2, 8, 1>}, {transform_indices = @transform_2, window_bounds = array<i64: 2, 1, 32>}]} {
    %c0_i32 = arith.constant 0 : i32
    %0 = arith.cmpi eq, %arg2, %c0_i32 : i32
    %1 = arith.extui %0 : i1 to i32
    %c0_i32_0 = arith.constant 0 : i32
    %2 = arith.cmpi ne, %1, %c0_i32_0 : i32
    scf.if %2 {
      %cst_13 = arith.constant 0.000000e+00 : f32
      %18 = vector.broadcast %cst_13 : f32 to vector<2x1x32xf32>
      %c0_14 = arith.constant 0 : index
      %c0_15 = arith.constant 0 : index
      %c0_16 = arith.constant 0 : index
      %19 = vector.load %arg6[%c0_14, %c0_15, %c0_16] : memref<2x1x32xf32, #tpu.memory_space<vmem>>, vector<2x1x32xf32>
      tpu.vector_store %arg6[%c0_14, %c0_15, %c0_16], %18 {strides = array<i32>} : memref<2x1x32xf32, #tpu.memory_space<vmem>>, vector<2x1x32xf32>,
    } else {
    }
    %c0 = arith.constant 0 : index
    %c0_1 = arith.constant 0 : index
    %c0_2 = arith.constant 0 : index
    %3 = vector.load %arg3[%c0, %c0_1, %c0_2] : memref<2x8x32xf32, #tpu.memory_space<vmem>>, vector<2x8x32xf32>
    %c8_i32 = arith.constant 8 : i32
    %4 = arith.muli %arg2, %c8_i32 : i32
    %5 = tpu.assume_multiple %4, 8 : i32
    %c0_3 = arith.constant 0 : index
    %6 = arith.index_cast %5 : i32 to index
    %c0_4 = arith.constant 0 : index
    %7 = vector.load %arg4[%c0_3, %6, %c0_4] : memref<2x8x1xf32, #tpu.memory_space<vmem>>, vector<2x8x1xf32>
    %c0_5 = arith.constant 0 : index
    %c0_6 = arith.constant 0 : index
    %c0_7 = arith.constant 0 : index
    %8 = vector.load %arg6[%c0_5, %c0_6, %c0_7] : memref<2x1x32xf32, #tpu.memory_space<vmem>>, vector<2x1x32xf32>
    %9 = vector.broadcast %7 : vector<2x8x1xf32> to vector<2x8x32xf32>
    %10 = arith.mulf %3, %9 : vector<2x8x32xf32>
    %cst = arith.constant dense<0.000000e+00> : vector<2x32xf32>
    %11 = vector.multi_reduction <add>, %10, %cst [1] : vector<2x8x32xf32> to vector<2x32xf32>
    %12 = vector.shape_cast %11 : vector<2x32xf32> to vector<2x1x32xf32>
    %13 = arith.addf %8, %12 : vector<2x1x32xf32>
    %c0_8 = arith.constant 0 : index
    %c0_9 = arith.constant 0 : index
    %c0_10 = arith.constant 0 : index
    %14 = vector.load %arg6[%c0_8, %c0_9, %c0_10] : memref<2x1x32xf32, #tpu.memory_space<vmem>>, vector<2x1x32xf32>
    tpu.vector_store %arg6[%c0_8, %c0_9, %c0_10], %13 {strides = array<i32>} : memref<2x1x32xf32, #tpu.memory_space<vmem>>, vector<2x1x32xf32>,
    %c0_i32_11 = arith.constant 0 : i32
    %15 = arith.cmpi eq, %arg2, %c0_i32_11 : i32
    %16 = arith.extui %15 : i1 to i32
    %c0_i32_12 = arith.constant 0 : i32
    %17 = arith.cmpi ne, %16, %c0_i32_12 : i32
    scf.if %17 {
      %c0_13 = arith.constant 0 : index
      %c0_14 = arith.constant 0 : index
      %c0_15 = arith.constant 0 : index
      %18 = vector.load %arg4[%c0_13, %c0_14, %c0_15] : memref<2x8x1xf32, #tpu.memory_space<vmem>>, vector<2x8x1xf32>
      %cst_16 = arith.constant dense<0.000000e+00> : vector<2x1xf32>
      %19 = vector.multi_reduction <add>, %18, %cst_16 [1] : vector<2x8x1xf32> to vector<2x1xf32>
      %20 = vector.shape_cast %19 : vector<2x1xf32> to vector<2x1x1xf32>
      %c0_17 = arith.constant 0 : index
      %c0_18 = arith.constant 0 : index
      %c0_19 = arith.constant 0 : index
      %21 = vector.load %arg6[%c0_17, %c0_18, %c0_19] : memref<2x1x32xf32, #tpu.memory_space<vmem>>, vector<2x1x32xf32>
      %cst_20 = arith.constant 9.99999997E-7 : f32
      %22 = vector.broadcast %cst_20 : f32 to vector<2x1x1xf32>
      %23 = arith.addf %20, %22 : vector<2x1x1xf32>
      %24 = vector.broadcast %23 : vector<2x1x1xf32> to vector<2x1x32xf32>
      %25 = arith.divf %21, %24 : vector<2x1x32xf32>
      %c0_21 = arith.constant 0 : index
      %c0_22 = arith.constant 0 : index
      %c0_23 = arith.constant 0 : index
      %26 = vector.load %arg5[%c0_21, %c0_22, %c0_23] : memref<2x1x32xf32, #tpu.memory_space<vmem>>, vector<2x1x32xf32>
      tpu.vector_store %arg5[%c0_21, %c0_22, %c0_23], %25 {strides = array<i32>} : memref<2x1x32xf32, #tpu.memory_space<vmem>>, vector<2x1x32xf32>,
    } else {
    }
    return
  }
  func.func @transform_0(%arg0: i32, %arg1: i32, %arg2: i32) -> (i32, i32, i32) {
    %c0_i32 = arith.constant 0 : i32
    return %arg0, %arg2, %arg1 : i32, i32, i32
  }
  func.func @transform_1(%arg0: i32, %arg1: i32, %arg2: i32) -> (i32, i32, i32) {
    %c0_i32 = arith.constant 0 : i32
    %c0_i32_0 = arith.constant 0 : i32
    %c0_i32_1 = arith.constant 0 : i32
    return %arg0, %c0_i32, %c0_i32_0 : i32, i32, i32
  }
  func.func @transform_2(%arg0: i32, %arg1: i32, %arg2: i32) -> (i32, i32, i32) {
    %c0_i32 = arith.constant 0 : i32
    %c0_i32_0 = arith.constant 0 : i32
    return %arg0, %c0_i32, %arg1 : i32, i32, i32
  }
}

</mosaic_0001>

<llo_original>
// kernel: tpu_custom_call.1
$region0: #{tpu_custom_call.1}
  #allocation0 [shape = 'u32[]', space=smem, size = 0x4, offset = 0x4, fixed_abs, tag = 'smem constant byte address 0x4 - core index']
  #allocation1 [shape = 'u32[72,128]{1,0:T(1,128)}', space=vmem, size = 0x9000, scoped, tag = 'internal scratch']
  #allocation2 [shape = 'f32[2,1,32]{2,1,0:T(1,128)}', space=vmem, size = 0x400, scoped, tag = 'scratch operand']
  %s0 = inlined_call_operand.vmem [shape: f32[2,8,32], index: 0, kind: input, shape index: {}]
  %s1 = inlined_call_operand.vmem [shape: f32[2,8,1], index: 1, kind: input, shape index: {}]
  %s2 = inlined_call_operand.hbm [shape: f32[2,1,32], index: 2, kind: output, shape index: {}]
  %s3 = sld [smem:[#allocation0]]
  $region26: #{tpu_custom_call.1} parent=0
    _
  %s5 = ssub.s32 1, %s3
  %s6 = scalar_select 0, %s5, %s3
  $region1: #{tpu_custom_call.1} parent=0
    #allocation3 [shape = 'u8[1024]{0}', space=vmem, size = 0x400, scoped, tag = 'output window, operand 0, single buffered']
    #allocation4 [shape = 's32[1]{0}', space=sflag, size = 0x4, scoped, tag = 'scoped memory for tpu_custom_call.1']
    %7 = vsyncpa [#allocation4], 0
    // Predicated region
    $region2: #{tpu_custom_call.1} parent=1 // pred_check
      _
    $region3: #{tpu_custom_call.1} parent=1 // pred_check_branch
      %9 = sbr.rel (0) target = $region5
    $region4: #{tpu_custom_call.1} parent=1 // pred_region
      _
    $region5: #{tpu_custom_call.1} parent=1 // pred_fallthru
      _
    // Predicated region
    $region6: #{tpu_custom_call.1} parent=1 // pred_check
      _
    $region7: #{tpu_custom_call.1} parent=1 // pred_check_branch
      %11 = sbr.rel (0) target = $region9
    $region8: #{tpu_custom_call.1} parent=1 // pred_region
      _
    $region9: #{tpu_custom_call.1} parent=1 // pred_fallthru
      _
    %p12 = scmp.eq.s32.totalorder 0, 0
    // Predicated region
    $region10: #{tpu_custom_call.1} parent=1 // pred_check
      %p13 = pneg %p12
    $region11: #{tpu_custom_call.1} parent=1 // pred_check_branch
      %15 = sbr.rel (%p13) target = $region13
    $region12: #{tpu_custom_call.1} parent=1 // pred_region
      %vm16 = vcmask 253952
      %17 = vst.msk [vmem:[#allocation2] sm:$0x1] %vm16, 0.0
      %18 = vst.msk [vmem:[#allocation2 + $0x1] sm:$0x1] %vm16, 0.0
    $region13: #{tpu_custom_call.1} parent=1 // pred_fallthru
      _
    %v19 = vld [vmem:[%s0] sm:$0xff]
    %v20 = vld [vmem:[%s0 + $0x8] sm:$0xff]
    %s21 = smul.u32 0, 8
    %s22 = scalar_lea.vmem %s1, %s21
    %v23 = vld [vmem:[%s22] sm:$0xff]
    %v24 = vld [vmem:[%s22 + $0x8] sm:$0xff]
    %v25 = vld [vmem:[#allocation2] sm:$0x1]
    %v26 = vld [vmem:[#allocation2 + $0x1] sm:$0x1]
    %28 = vset.pattern.permute.xlu0 0
    %29 = vperm.xlu0 %28, %v23
    %v30 = vpop.permute.xlu0 %29
    %33 = vset.pattern.permute.xlu0 0
    %34 = vperm.xlu0 %33, %v24
    %v35 = vpop.permute.xlu0 %34
    %v37 = vmul.f32 %v19, %v30
    %v38 = vmul.f32 %v20, %v35
    %vm39 = vcmask 261120
    %v40 = vsel %vm39, %v37, 0.0
    %v41 = vrot.slane %v40, 4
    %v42 = vadd.f32 %v40, %v41
    %v43 = vrot.slane %v42, 2
    %v44 = vadd.f32 %v42, %v43
    %v45 = vrot.slane %v44, 1
    %v46 = vadd.f32 %v44, %v45
    %v47 = vsel %vm39, %v38, 0.0
    %v48 = vrot.slane %v47, 4
    %v49 = vadd.f32 %v47, %v48
    %v50 = vrot.slane %v49, 2
    %v51 = vadd.f32 %v49, %v50
    %v52 = vrot.slane %v51, 1
    %v53 = vadd.f32 %v51, %v52
    %v54 = vadd.f32 %v25, %v46
    %v55 = vadd.f32 %v26, %v53
    %vm56 = vcmask 253952
    %57 = vst.msk [vmem:[#allocation2] sm:$0x1] %vm56, %v54
    %58 = vst.msk [vmem:[#allocation2 + $0x1] sm:$0x1] %vm56, %v55
    // Predicated region
    $region14: #{tpu_custom_call.1} parent=1 // pred_check
      %p59 = pneg %p12
    $region15: #{tpu_custom_call.1} parent=1 // pred_check_branch
      %61 = sbr.rel (%p59) target = $region17
    $region16: #{tpu_custom_call.1} parent=1 // pred_region
      %v62 = vld [vmem:[%s1] sm:$0xff]
      %v63 = vld [vmem:[%s1 + $0x8] sm:$0xff]
      %vm64 = vcmask 7168
      %v65 = vsel %vm64, %v62, 0.0
      %v66 = vrot.slane %v65, 4
      %v67 = vadd.f32 %v65, %v66
      %v68 = vrot.slane %v67, 2
      %v69 = vadd.f32 %v67, %v68
      %v70 = vrot.slane %v69, 1
      %v71 = vadd.f32 %v69, %v70
      %v72 = vsel %vm64, %v63, 0.0
      %v73 = vrot.slane %v72, 4
      %v74 = vadd.f32 %v72, %v73
      %v75 = vrot.slane %v74, 2
      %v76 = vadd.f32 %v74, %v75
      %v77 = vrot.slane %v76, 1
      %v78 = vadd.f32 %v76, %v77
      %v79 = vld [vmem:[#allocation2] sm:$0x1]
      %v80 = vld [vmem:[#allocation2 + $0x1] sm:$0x1]
      %v81 = vadd.f32 %v71, 1e-06
      %v82 = vadd.f32 %v78, 1e-06
      %84 = vset.pattern.permute.xlu0 0
      %85 = vperm.xlu0 %84, %v81
      %v86 = vpop.permute.xlu0 %85
      %89 = vset.pattern.permute.xlu0 0
      %90 = vperm.xlu0 %89, %v82
      %v91 = vpop.permute.xlu0 %90
      %v93 = vrcp.pop %v86
      %v94 = vmul.f32 %v86, %v93
      %v95 = vsub.f32 1.0, %v94
      %v96 = vmul.f32 %v93, %v95
      %v97 = vadd.f32 %v93, %v96
      %vm98 = vweird.f32 %v86
      %vm99 = vweird.f32 %v93
      %vm100 = vmor %vm98, %vm99
      %v101 = vsel %vm100, %v93, %v97
      %v102 = vand.u32 2147483647, %v86
      %vm103 = vcmp.eq.f32.partialorder %v102, 8.507059e+37
      %v104 = vand.u32 %v86, 2147483648
      %v105 = vor.u32 1.1754944e-38, %v104
      %v106 = vsel %vm103, %v105, %v101
      %v107 = vmul.f32 %v79, %v106
      %v108 = vrcp.pop %v91
      %v109 = vmul.f32 %v91, %v108
      %v110 = vsub.f32 1.0, %v109
      %v111 = vmul.f32 %v108, %v110
      %v112 = vadd.f32 %v108, %v111
      %vm113 = vweird.f32 %v91
      %vm114 = vweird.f32 %v108
      %vm115 = vmor %vm113, %vm114
      %v116 = vsel %vm115, %v108, %v112
      %v117 = vand.u32 2147483647, %v91
      %vm118 = vcmp.eq.f32.partialorder %v117, 8.507059e+37
      %v119 = vand.u32 %v91, 2147483648
      %v120 = vor.u32 1.1754944e-38, %v119
      %v121 = vsel %vm118, %v120, %v116
      %v122 = vmul.f32 %v80, %v121
      %123 = vst.msk [vmem:[#allocation3] sm:$0x1] %vm56, %v107
      %124 = vst.msk [vmem:[#allocation3 + $0x1] sm:$0x1] %vm56, %v122
    $region17: #{tpu_custom_call.1} parent=1 // pred_fallthru
      _
    // Predicated region
    $region18: #{tpu_custom_call.1} parent=1 // pred_check
      _
    $region19: #{tpu_custom_call.1} parent=1 // pred_check_branch
      %126 = sbr.rel (0) target = $region21
    $region20: #{tpu_custom_call.1} parent=1 // pred_region
      %128 = vsyncadd [#allocation4], 0
      %s129 = sshll.u32 [#allocation3], 4
      %s130 = int_to_ptr.vmem [resolvable:$true] %s129
      %s131 = sshll.u32 %s2, 4
      %s132 = int_to_ptr.hbm [resolvable:$true] %s131
      %137 = dma.vmem_to_hbm [thread:$0]  %s130, 32, %s132, [#allocation4], 16, 16, 1
    $region21: #{tpu_custom_call.1} parent=1 // pred_fallthru
      _
    // Predicated region
    $region22: #{tpu_custom_call.1} parent=1 // pred_check
      _
    $region23: #{tpu_custom_call.1} parent=1 // pred_check_branch
      %139 = sbr.rel (0) target = $region25
    $region24: #{tpu_custom_call.1} parent=1 // pred_region
      %141 = dma.done [#allocation4], 32
    $region25: #{tpu_custom_call.1} parent=1 // pred_fallthru
      _
    %142 = vsyncpa [#allocation4], 1

</llo_original>
